<compile_context>
chip_gen: v5e
topology: v5e:2x2
jax: 0.10.0
libtpu: 0.0.40
codegen_flags: <defaults>
</compile_context>

<pallas_src>
import functools

import jax
import jax.numpy as jnp
from jax import lax
from jax.experimental import pallas as pl
from jax.experimental.pallas import tpu as pltpu
from jax.scipy.linalg import block_diag


def _round_up(x, m):
    return -(-x // m) * m


def _hetero_gnn_kernel(m_ref, x4_ref, gT_ref, w_ref, pb_ref, wh_ref, bh_ref,
                       wf_ref, bf_ref, out_ref, pooled_ref, *, tiles_C):
    """One dst-node tile per grid step; head/final stages on the last tile."""
    f32 = jnp.float32
    i = pl.program_id(0)
    t = (i >= tiles_C).astype(jnp.int32)      # 0 = C-dst tile, 1 = H-dst tile

    @pl.when(i == 0)
    def _():
        pooled_ref[...] = jnp.zeros_like(pooled_ref)

    # ---- hetero message passing for this dst tile (bf16 operands, f32 acc) ---
    feat = jnp.dot(m_ref[...], x4_ref[...], preferred_element_type=f32)      # [T, 4F]
    out_tile = jnp.dot(feat, w_ref[t], preferred_element_type=f32)           # [T, C]

    # ---- per-graph scatter(sum) pooling for this tile ------------------------
    # gT_ref tile is [T, Gp]; contract the node axis of both operands.
    contrib = lax.dot_general(gT_ref[...], out_tile,
                              (((0,), (0,)), ((), ())),
                              preferred_element_type=f32)                    # [Gp, C]
    pooled_ref[t] = pooled_ref[t] + contrib

    # ---- head + final stages only once, on the last tile ---------------------
    @pl.when(i == pl.num_programs(0) - 1)
    def _():
        pooled_C = jnp.maximum(pooled_ref[0] + pb_ref[0], 0.0)               # [Gp, C]
        pooled_H = jnp.maximum(pooled_ref[1] + pb_ref[1], 0.0)
        head_C = jnp.maximum(
            jnp.dot(pooled_C, wh_ref[0], preferred_element_type=f32) + bh_ref[0], 0.0)
        head_H = jnp.maximum(
            jnp.dot(pooled_H, wh_ref[1], preferred_element_type=f32) + bh_ref[1], 0.0)
        # final 1-wide head: VPU multiply + lane reduce (no 1-column MXU dot)
        out_ref[...] = (jnp.sum(head_C * wf_ref[0], axis=-1, keepdims=True)
                        + jnp.sum(head_H * wf_ref[1], axis=-1, keepdims=True)
                        + bf_ref[...])                                       # [Gp, 1]


def _forward_impl(params, x_C, x_H, edge_index_dict, C_group, H_group,
                  num_graphs, tile_n):
    (Wl_CC, Wr_CC, b_CC, Wl_HC, Wr_HC, b_HC,
     Wl_CH, Wr_CH, b_CH, Wl_HH, Wr_HH, b_HH,
     WC, bC, WH, bH, WhC, WhH, bh) = params

    f32, bf16 = jnp.float32, jnp.bfloat16
    N_C, F = x_C.shape
    N_H = x_H.shape[0]
    C = Wl_CC.shape[1]                  # out_channels
    hd = WC.shape[1]                    # head_dim
    G = num_graphs
    Gp = _round_up(max(G, 8), 8)        # sublane-aligned graph count

    T = _round_up(max(tile_n, 8), 8)    # dst-node tile (sublane multiple)
    N_Cp = _round_up(N_C, T)
    N_Hp = _round_up(N_H, T)
    K = 2 * (N_C + N_H)                 # [src-C | src-H | self-C | self-H]
    Kp = _round_up(K, 128)              # lane-dense contraction dim
    F4 = 4 * F
    tiles_C = N_Cp // T
    tiles_H = N_Hp // T
    n_tiles = tiles_C + tiles_H

    # Dense 0/1-count adjacency so scatter-add == matmul (duplicate edges counted).
    # TODO(synk): sparse CSR aggregation for realistic graph sizes.
    def dense_adj(edge_index, n_dst, n_src):
        src, dst = edge_index[0], edge_index[1]
        return jnp.zeros((n_dst, n_src), f32).at[dst, src].add(1.0)

    A_CC = dense_adj(edge_index_dict[('C', 'CC', 'C')], N_C, N_C)
    A_HC = dense_adj(edge_index_dict[('H', 'HC', 'C')], N_C, N_H)
    A_CH = dense_adj(edge_index_dict[('C', 'CH', 'H')], N_H, N_C)
    A_HH = dense_adj(edge_index_dict[('H', 'HH', 'H')], N_H, N_H)

    # Per-dst-type gather operator: [agg-from-C | agg-from-H | self-C | self-H].
    I_C, I_H = jnp.eye(N_C, dtype=f32), jnp.eye(N_H, dtype=f32)
    M_C = jnp.concatenate([A_CC, A_HC, I_C, jnp.zeros((N_C, N_H), f32)], axis=1)  # [N_C, K]
    M_H = jnp.concatenate([A_CH, A_HH, jnp.zeros((N_H, N_C), f32), I_H], axis=1)  # [N_H, K]
    M = jnp.concatenate([
        jnp.pad(M_C, ((0, N_Cp - N_C), (0, Kp - K))),
        jnp.pad(M_H, ((0, N_Hp - N_H), (0, Kp - K)))], axis=0).astype(bf16)       # [N_Cp+N_Hp, Kp]

    X4 = block_diag(x_C, x_H, x_C, x_H)                       # [K, 4F]
    X4 = jnp.pad(X4, ((0, Kp - K), (0, 0))).astype(bf16)      # [Kp, 4F]

    # Conv weights per dst type: [Wl_from_C; Wl_from_H; Wr_self_C; Wr_self_H].
    W_Cblk = jnp.concatenate([Wl_CC, Wl_HC, Wr_CC + Wr_HC, jnp.zeros((F, C), f32)], axis=0)
    W_Hblk = jnp.concatenate([Wl_CH, Wl_HH, jnp.zeros((F, C), f32), Wr_CH + Wr_HH], axis=0)
    W_stk = jnp.stack([W_Cblk, W_Hblk])                       # [2, 4F, C] f32 (small)

    # Per-graph pooling (torch_scatter sum == matmul), stored transposed so the
    # dst-node tile lives on the sublane axis.  Conv biases folded per graph.
    G_C = jax.nn.one_hot(C_group, Gp, dtype=f32)              # [N_C, Gp]
    G_H = jax.nn.one_hot(H_group, Gp, dtype=f32)              # [N_H, Gp]
    GT = jnp.concatenate([
        jnp.pad(G_C, ((0, N_Cp - N_C), (0, 0))),
        jnp.pad(G_H, ((0, N_Hp - N_H), (0, 0)))], axis=0)     # [N_Cp+N_Hp, Gp]
    cnt_C = jnp.sum(G_C, axis=0)[:, None]                     # [Gp, 1]
    cnt_H = jnp.sum(G_H, axis=0)[:, None]
    pb_stk = jnp.stack([cnt_C * (b_CC + b_HC), cnt_H * (b_CH + b_HH)])  # [2, Gp, C]

    wh_stk = jnp.stack([WC, WH])                              # [2, C, hd]
    bh_stk = jnp.stack([bC, bH])                              # [2, 1, hd]
    wf_stk = jnp.stack([WhC.T, WhH.T])                        # [2, 1, hd]
    bf = bh                                                   # [1, 1]

    kernel = functools.partial(_hetero_gnn_kernel, tiles_C=tiles_C)

    # VMEM budget: double-buffered M/GT tiles + resident X4 + small params.
    est = (2 * T * Kp * 2 + 2 * Kp * F4 * 2 + 2 * T * Gp * 4
           + 2 * 4 * (W_stk.size + pb_stk.size + wh_stk.size
                      + bh_stk.size + wf_stk.size)
           + 2 * Gp * C * 4 + Gp * 4 + 4096)
    vmem_limit = int(min(64 * 2**20, max(16 * 2**20, 4 * est)))

    out = pl.pallas_call(
        kernel,
        out_shape=jax.ShapeDtypeStruct((Gp, 1), f32),
        grid=(n_tiles,),
        in_specs=[
            pl.BlockSpec((T, Kp), lambda i: (i, 0)),          # gather-matrix row tile
            pl.BlockSpec((Kp, F4), lambda i: (0, 0)),         # features (resident)
            pl.BlockSpec((T, Gp), lambda i: (i, 0)),          # pooling rows (transposed)
            pl.BlockSpec((2, F4, C), lambda i: (0, 0, 0)),    # conv weight blocks
            pl.BlockSpec((2, Gp, C), lambda i: (0, 0, 0)),    # pooled biases
            pl.BlockSpec((2, C, hd), lambda i: (0, 0, 0)),    # head weights
            pl.BlockSpec((2, 1, hd), lambda i: (0, 0, 0)),    # head biases
            pl.BlockSpec((2, 1, hd), lambda i: (0, 0, 0)),    # final head rows
            pl.BlockSpec((1, 1), lambda i: (0, 0)),           # final bias
        ],
        out_specs=pl.BlockSpec((Gp, 1), lambda i: (0, 0)),
        scratch_shapes=[pltpu.VMEM((2, Gp, C), jnp.float32)],
        compiler_params=pltpu.CompilerParams(
            dimension_semantics=("arbitrary",),               # pooled reduction axis
            vmem_limit_bytes=vmem_limit,
        ),
    )(M, X4, GT, W_stk, pb_stk, wh_stk, bh_stk, wf_stk, bf)
    return out[:G, 0]


_forward_jit = jax.jit(_forward_impl, static_argnums=(6, 7))


def hetero_gnn_forward(params, x_C, x_H, edge_index_dict, C_group, H_group,
                       num_graphs, tile_n=128):
    return _forward_jit(params, x_C, x_H, edge_index_dict, C_group, H_group,
                        num_graphs, tile_n)


def reference_forward(params, x_C, x_H, edge_index_dict, C_group, H_group, num_graphs):
    """Pure-JAX (f32) reference mirroring the PyTorch semantics."""
    (Wl_CC, Wr_CC, b_CC, Wl_HC, Wr_HC, b_HC,
     Wl_CH, Wr_CH, b_CH, Wl_HH, Wr_HH, b_HH,
     WC, bC, WH, bH, WhC, WhH, bh) = params

    def agg(edge_index, x_src, n_dst):
        src, dst = edge_index[0], edge_index[1]
        return jnp.zeros((n_dst, x_src.shape[1]), jnp.float32).at[dst].add(x_src[src])

    N_C, N_H = x_C.shape[0], x_H.shape[0]
    out_C = (agg(edge_index_dict[('C', 'CC', 'C')], x_C, N_C) @ Wl_CC + x_C @ Wr_CC + b_CC
             + agg(edge_index_dict[('H', 'HC', 'C')], x_H, N_C) @ Wl_HC + x_C @ Wr_HC + b_HC)
    out_H = (agg(edge_index_dict[('C', 'CH', 'H')], x_C, N_H) @ Wl_CH + x_H @ Wr_CH + b_CH
             + agg(edge_index_dict[('H', 'HH', 'H')], x_H, N_H) @ Wl_HH + x_H @ Wr_HH + b_HH)

    C_pool = jnp.maximum(
        jnp.zeros((num_graphs, out_C.shape[1]), jnp.float32).at[C_group].add(out_C), 0.0)
    H_pool = jnp.maximum(
        jnp.zeros((num_graphs, out_H.shape[1]), jnp.float32).at[H_group].add(out_H), 0.0)

    C_out = C_pool @ WC + bC
    H_out = H_pool @ WH + bH
    return (jnp.maximum(C_out, 0.0) @ WhC + jnp.maximum(H_out, 0.0) @ WhH + bh)[:, 0]


if __name__ == "__main__":
    in_channels, out_channels, head_dim = 16, 32, 16
    N_C, N_H, num_graphs = 24, 40, 4
    n_edges = {"CC": 64, "CH": 48, "HC": 48, "HH": 80}

    key = jax.random.PRNGKey(0)
    keys = iter(jax.random.split(key, 32))

    x_C = jax.random.normal(next(keys), (N_C, in_channels), jnp.float32)
    x_H = jax.random.normal(next(keys), (N_H, in_channels), jnp.float32)

    def rand_edges(k, n_src, n_dst, e):
        k1, k2 = jax.random.split(k)
        src = jax.random.randint(k1, (e,), 0, n_src)
        dst = jax.random.randint(k2, (e,), 0, n_dst)
        return jnp.stack([src, dst])

    edge_index_dict = {
        ('C', 'CC', 'C'): rand_edges(next(keys), N_C, N_C, n_edges["CC"]),
        ('C', 'CH', 'H'): rand_edges(next(keys), N_C, N_H, n_edges["CH"]),
        ('H', 'HC', 'C'): rand_edges(next(keys), N_H, N_C, n_edges["HC"]),
        ('H', 'HH', 'H'): rand_edges(next(keys), N_H, N_H, n_edges["HH"]),
    }
    C_group = jax.random.randint(next(keys), (N_C,), 0, num_graphs)
    H_group = jax.random.randint(next(keys), (N_H,), 0, num_graphs)

    def linear_init(k, fan_in, fan_out):
        kw, kb = jax.random.split(k)
        lim = 1.0 / float(fan_in) ** 0.5
        W = jax.random.uniform(kw, (fan_in, fan_out), jnp.float32, -lim, lim)
        b = jax.random.uniform(kb, (1, fan_out), jnp.float32, -lim, lim)
        return W, b

    params = []
    # 4 edge-type convs (to_hetero clones the base conv per edge type):
    # each has W_neigh, W_self, bias.
    for _ in range(4):
        Wl, b = linear_init(next(keys), in_channels, out_channels)
        Wr, _ = linear_init(next(keys), in_channels, out_channels)
        params += [Wl, Wr, b]
    WC, bC = linear_init(next(keys), out_channels, head_dim)
    params += [WC, bC]
    WH, bH = linear_init(next(keys), out_channels, head_dim)
    params += [WH, bH]
    Wh, bh = linear_init(next(keys), 2 * head_dim, 1)
    params += [Wh[:head_dim], Wh[head_dim:], bh]   # split for concat-free final stage
    params = tuple(params)

    # Small tile so the node-tile grid / accumulator path is actually exercised
    # (2 C-tiles + 3 H-tiles -> grid of 5).
    out = hetero_gnn_forward(params, x_C, x_H, edge_index_dict,
                             C_group, H_group, num_graphs, tile_n=16)
    out = jax.block_until_ready(out)

    ref = reference_forward(params, x_C, x_H, edge_index_dict,
                            C_group, H_group, num_graphs)
    assert out.shape == (num_graphs,)
    # bf16 streamed operands -> loosened (relative) tolerance vs. the f32 reference.
    err = float(jnp.max(jnp.abs(out - ref)))
    scale = float(jnp.maximum(1.0, jnp.max(jnp.abs(ref))))
    assert err <= 3e-2 * scale, (err, out, ref)
    print("KERNEL_OK")
</pallas_src>

<mosaic_0001>
module attributes {stable_mosaic.version = 11 : i64} {
  func.func @_hetero_gnn_kernel(%arg0: i32, %arg1: memref<16x128xbf16, #tpu.memory_space<vmem>>, %arg2: memref<128x64xbf16, #tpu.memory_space<vmem>>, %arg3: memref<16x8xf32, #tpu.memory_space<vmem>>, %arg4: memref<2x64x32xf32, #tpu.memory_space<vmem>>, %arg5: memref<2x8x32xf32, #tpu.memory_space<vmem>>, %arg6: memref<2x32x16xf32, #tpu.memory_space<vmem>>, %arg7: memref<2x1x16xf32, #tpu.memory_space<vmem>>, %arg8: memref<2x1x16xf32, #tpu.memory_space<vmem>>, %arg9: memref<1x1xf32, #tpu.memory_space<vmem>>, %arg10: memref<8x1xf32, #tpu.memory_space<vmem>>, %arg11: memref<2x8x32xf32, #tpu.memory_space<vmem>>) attributes {dimension_semantics = [#tpu.dimension_semantics<arbitrary>], iteration_bounds = array<i64: 5>, scalar_prefetch = 0 : i64, scratch_operands = 1 : i64, tpu.core_type = #tpu.core_type<tc>, window_params = [{transform_indices = @transform_0, window_bounds = array<i64: 16, 128>}, {pipeline_mode = #tpu.pipeline_mode<synchronous>, transform_indices = @transform_1, window_bounds = array<i64: 128, 64>}, {transform_indices = @transform_2, window_bounds = array<i64: 16, 8>}, {pipeline_mode = #tpu.pipeline_mode<synchronous>, transform_indices = @transform_3, window_bounds = array<i64: 2, 64, 32>}, {pipeline_mode = #tpu.pipeline_mode<synchronous>, transform_indices = @transform_4, window_bounds = array<i64: 2, 8, 32>}, {pipeline_mode = #tpu.pipeline_mode<synchronous>, transform_indices = @transform_5, window_bounds = array<i64: 2, 32, 16>}, {pipeline_mode = #tpu.pipeline_mode<synchronous>, transform_indices = @transform_6, window_bounds = array<i64: 2, 1, 16>}, {pipeline_mode = #tpu.pipeline_mode<synchronous>, transform_indices = @transform_7, window_bounds = array<i64: 2, 1, 16>}, {pipeline_mode = #tpu.pipeline_mode<synchronous>, transform_indices = @transform_8, window_bounds = array<i64: 1, 1>}, {pipeline_mode = #tpu.pipeline_mode<synchronous>, transform_indices = @transform_9, window_bounds = array<i64: 8, 1>}]} {
    %c2_i32 = arith.constant 2 : i32
    %0 = arith.cmpi sge, %arg0, %c2_i32 : i32
    %1 = arith.extui %0 : i1 to i32
    %c0_i32 = arith.constant 0 : i32
    %2 = arith.cmpi eq, %arg0, %c0_i32 : i32
    %3 = arith.extui %2 : i1 to i32
    %c0_i32_0 = arith.constant 0 : i32
    %4 = arith.cmpi ne, %3, %c0_i32_0 : i32
    scf.if %4 {
      %cst_15 = arith.constant 0.000000e+00 : f32
      %25 = vector.broadcast %cst_15 : f32 to vector<2x8x32xf32>
      %c0_16 = arith.constant 0 : index
      %c0_17 = arith.constant 0 : index
      %c0_18 = arith.constant 0 : index
      %26 = vector.load %arg11[%c0_16, %c0_17, %c0_18] : memref<2x8x32xf32, #tpu.memory_space<vmem>>, vector<2x8x32xf32>
      tpu.vector_store %arg11[%c0_16, %c0_17, %c0_18], %25 {strides = array<i32>} : memref<2x8x32xf32, #tpu.memory_space<vmem>>, vector<2x8x32xf32>,
    } else {
    }
    %c0 = arith.constant 0 : index
    %c0_1 = arith.constant 0 : index
    %5 = vector.load %arg1[%c0, %c0_1] : memref<16x128xbf16, #tpu.memory_space<vmem>>, vector<16x128xbf16>
    %c0_2 = arith.constant 0 : index
    %c0_3 = arith.constant 0 : index
    %6 = vector.load %arg2[%c0_2, %c0_3] : memref<128x64xbf16, #tpu.memory_space<vmem>>, vector<128x64xbf16>
    %cst = arith.constant dense<0.000000e+00> : vector<16x64xf32>
    %7 = tpu.matmul %5, %6, %cst {dimension_numbers = #tpu.dot_dimension_numbers<[1], [0], [0], [1], [0, 0, 1, 1], [], []>} : vector<16x128xbf16>, vector<128x64xbf16>, vector<16x64xf32> -> vector<16x64xf32>
    %8 = arith.index_cast %1 : i32 to index
    %c0_4 = arith.constant 0 : index
    %c0_5 = arith.constant 0 : index
    %9 = vector.load %arg4[%8, %c0_4, %c0_5] : memref<2x64x32xf32, #tpu.memory_space<vmem>>, vector<1x64x32xf32>
    %10 = vector.shape_cast %9 : vector<1x64x32xf32> to vector<64x32xf32>
    %cst_6 = arith.constant dense<0.000000e+00> : vector<16x32xf32>
    %11 = tpu.matmul %7, %10, %cst_6 {dimension_numbers = #tpu.dot_dimension_numbers<[1], [0], [0], [1], [0, 0, 1, 1], [], []>} : vector<16x64xf32>, vector<64x32xf32>, vector<16x32xf32> -> vector<16x32xf32>
    %c0_7 = arith.constant 0 : index
    %c0_8 = arith.constant 0 : index
    %12 = vector.load %arg3[%c0_7, %c0_8] : memref<16x8xf32, #tpu.memory_space<vmem>>, vector<16x8xf32>
    %cst_9 = arith.constant dense<0.000000e+00> : vector<8x32xf32>
    %13 = tpu.matmul %12, %11, %cst_9 {dimension_numbers = #tpu.dot_dimension_numbers<[0], [0], [1], [1], [0, 1, 1, 1], [], []>} : vector<16x8xf32>, vector<16x32xf32>, vector<8x32xf32> -> vector<8x32xf32>
    %14 = arith.index_cast %1 : i32 to index
    %c0_10 = arith.constant 0 : index
    %c0_11 = arith.constant 0 : index
    %15 = vector.load %arg11[%14, %c0_10, %c0_11] : memref<2x8x32xf32, #tpu.memory_space<vmem>>, vector<1x8x32xf32>
    %16 = vector.shape_cast %15 : vector<1x8x32xf32> to vector<8x32xf32>
    %17 = arith.addf %16, %13 : vector<8x32xf32>
    %18 = arith.index_cast %1 : i32 to index
    %c0_12 = arith.constant 0 : index
    %c0_13 = arith.constant 0 : index
    %19 = vector.load %arg11[%18, %c0_12, %c0_13] : memref<2x8x32xf32, #tpu.memory_space<vmem>>, vector<1x8x32xf32>
    %20 = vector.shape_cast %19 : vector<1x8x32xf32> to vector<8x32xf32>
    %21 = vector.shape_cast %17 : vector<8x32xf32> to vector<1x8x32xf32>
    tpu.vector_store %arg11[%18, %c0_12, %c0_13], %21 {strides = array<i32>} : memref<2x8x32xf32, #tpu.memory_space<vmem>>, vector<1x8x32xf32>,
    %c4_i32 = arith.constant 4 : i32
    %22 = arith.cmpi eq, %arg0, %c4_i32 : i32
    %23 = arith.extui %22 : i1 to i32
    %c0_i32_14 = arith.constant 0 : i32
    %24 = arith.cmpi ne, %23, %c0_i32_14 : i32
    scf.if %24 {
      %c0_15 = arith.constant 0 : index
      %c0_16 = arith.constant 0 : index
      %c0_17 = arith.constant 0 : index
      %25 = vector.load %arg11[%c0_15, %c0_16, %c0_17] : memref<2x8x32xf32, #tpu.memory_space<vmem>>, vector<1x8x32xf32>
      %26 = vector.shape_cast %25 : vector<1x8x32xf32> to vector<8x32xf32>
      %c0_18 = arith.constant 0 : index
      %c0_19 = arith.constant 0 : index
      %c0_20 = arith.constant 0 : index
      %27 = vector.load %arg5[%c0_18, %c0_19, %c0_20] : memref<2x8x32xf32, #tpu.memory_space<vmem>>, vector<1x8x32xf32>
      %28 = vector.shape_cast %27 : vector<1x8x32xf32> to vector<8x32xf32>
      %29 = arith.addf %26, %28 : vector<8x32xf32>
      %cst_21 = arith.constant 0.000000e+00 : f32
      %30 = vector.broadcast %cst_21 : f32 to vector<8x32xf32>
      %31 = arith.maximumf %29, %30 : vector<8x32xf32>
      %c1 = arith.constant 1 : index
      %c0_22 = arith.constant 0 : index
      %c0_23 = arith.constant 0 : index
      %32 = vector.load %arg11[%c1, %c0_22, %c0_23] : memref<2x8x32xf32, #tpu.memory_space<vmem>>, vector<1x8x32xf32>
      %33 = vector.shape_cast %32 : vector<1x8x32xf32> to vector<8x32xf32>
      %c1_24 = arith.constant 1 : index
      %c0_25 = arith.constant 0 : index
      %c0_26 = arith.constant 0 : index
      %34 = vector.load %arg5[%c1_24, %c0_25, %c0_26] : memref<2x8x32xf32, #tpu.memory_space<vmem>>, vector<1x8x32xf32>
      %35 = vector.shape_cast %34 : vector<1x8x32xf32> to vector<8x32xf32>
      %36 = arith.addf %33, %35 : vector<8x32xf32>
      %cst_27 = arith.constant 0.000000e+00 : f32
      %37 = vector.broadcast %cst_27 : f32 to vector<8x32xf32>
      %38 = arith.maximumf %36, %37 : vector<8x32xf32>
      %c0_28 = arith.constant 0 : index
      %c0_29 = arith.constant 0 : index
      %c0_30 = arith.constant 0 : index
      %39 = vector.load %arg6[%c0_28, %c0_29, %c0_30] : memref<2x32x16xf32, #tpu.memory_space<vmem>>, vector<1x32x16xf32>
      %40 = vector.shape_cast %39 : vector<1x32x16xf32> to vector<32x16xf32>
      %cst_31 = arith.constant dense<0.000000e+00> : vector<8x16xf32>
      %41 = tpu.matmul %31, %40, %cst_31 {dimension_numbers = #tpu.dot_dimension_numbers<[1], [0], [0], [1], [0, 0, 1, 1], [], []>} : vector<8x32xf32>, vector<32x16xf32>, vector<8x16xf32> -> vector<8x16xf32>
      %c0_32 = arith.constant 0 : index
      %c0_33 = arith.constant 0 : index
      %c0_34 = arith.constant 0 : index
      %42 = vector.load %arg7[%c0_32, %c0_33, %c0_34] : memref<2x1x16xf32, #tpu.memory_space<vmem>>, vector<1x1x16xf32>
      %43 = vector.shape_cast %42 : vector<1x1x16xf32> to vector<1x16xf32>
      %44 = vector.broadcast %43 : vector<1x16xf32> to vector<8x16xf32>
      %45 = arith.addf %41, %44 : vector<8x16xf32>
      %cst_35 = arith.constant 0.000000e+00 : f32
      %46 = vector.broadcast %cst_35 : f32 to vector<8x16xf32>
      %47 = arith.maximumf %45, %46 : vector<8x16xf32>
      %c1_36 = arith.constant 1 : index
      %c0_37 = arith.constant 0 : index
      %c0_38 = arith.constant 0 : index
      %48 = vector.load %arg6[%c1_36, %c0_37, %c0_38] : memref<2x32x16xf32, #tpu.memory_space<vmem>>, vector<1x32x16xf32>
      %49 = vector.shape_cast %48 : vector<1x32x16xf32> to vector<32x16xf32>
      %cst_39 = arith.constant dense<0.000000e+00> : vector<8x16xf32>
      %50 = tpu.matmul %38, %49, %cst_39 {dimension_numbers = #tpu.dot_dimension_numbers<[1], [0], [0], [1], [0, 0, 1, 1], [], []>} : vector<8x32xf32>, vector<32x16xf32>, vector<8x16xf32> -> vector<8x16xf32>
      %c1_40 = arith.constant 1 : index
      %c0_41 = arith.constant 0 : index
      %c0_42 = arith.constant 0 : index
      %51 = vector.load %arg7[%c1_40, %c0_41, %c0_42] : memref<2x1x16xf32, #tpu.memory_space<vmem>>, vector<1x1x16xf32>
      %52 = vector.shape_cast %51 : vector<1x1x16xf32> to vector<1x16xf32>
      %53 = vector.broadcast %52 : vector<1x16xf32> to vector<8x16xf32>
      %54 = arith.addf %50, %53 : vector<8x16xf32>
      %cst_43 = arith.constant 0.000000e+00 : f32
      %55 = vector.broadcast %cst_43 : f32 to vector<8x16xf32>
      %56 = arith.maximumf %54, %55 : vector<8x16xf32>
      %c0_44 = arith.constant 0 : index
      %c0_45 = arith.constant 0 : index
      %c0_46 = arith.constant 0 : index
      %57 = vector.load %arg8[%c0_44, %c0_45, %c0_46] : memref<2x1x16xf32, #tpu.memory_space<vmem>>, vector<1x1x16xf32>
      %58 = vector.shape_cast %57 : vector<1x1x16xf32> to vector<1x16xf32>
      %59 = vector.broadcast %58 : vector<1x16xf32> to vector<8x16xf32>
      %60 = arith.mulf %47, %59 : vector<8x16xf32>
      %cst_47 = arith.constant dense<0.000000e+00> : vector<8xf32>
      %61 = vector.multi_reduction <add>, %60, %cst_47 [1] : vector<8x16xf32> to vector<8xf32>
      %62 = vector.shape_cast %61 : vector<8xf32> to vector<8x1xf32>
      %c1_48 = arith.constant 1 : index
      %c0_49 = arith.constant 0 : index
      %c0_50 = arith.constant 0 : index
      %63 = vector.load %arg8[%c1_48, %c0_49, %c0_50] : memref<2x1x16xf32, #tpu.memory_space<vmem>>, vector<1x1x16xf32>
      %64 = vector.shape_cast %63 : vector<1x1x16xf32> to vector<1x16xf32>
      %65 = vector.broadcast %64 : vector<1x16xf32> to vector<8x16xf32>
      %66 = arith.mulf %56, %65 : vector<8x16xf32>
      %cst_51 = arith.constant dense<0.000000e+00> : vector<8xf32>
      %67 = vector.multi_reduction <add>, %66, %cst_51 [1] : vector<8x16xf32> to vector<8xf32>
      %68 = vector.shape_cast %67 : vector<8xf32> to vector<8x1xf32>
      %69 = arith.addf %62, %68 : vector<8x1xf32>
      %c0_52 = arith.constant 0 : index
      %c0_53 = arith.constant 0 : index
      %70 = vector.load %arg9[%c0_52, %c0_53] : memref<1x1xf32, #tpu.memory_space<vmem>>, vector<1x1xf32>
      %71 = vector.broadcast %70 : vector<1x1xf32> to vector<8x1xf32>
      %72 = arith.addf %69, %71 : vector<8x1xf32>
      %c0_54 = arith.constant 0 : index
      %c0_55 = arith.constant 0 : index
      %73 = vector.load %arg10[%c0_54, %c0_55] : memref<8x1xf32, #tpu.memory_space<vmem>>, vector<8x1xf32>
      tpu.vector_store %arg10[%c0_54, %c0_55], %72 {strides = array<i32>} : memref<8x1xf32, #tpu.memory_space<vmem>>, vector<8x1xf32>,
    } else {
    }
    return
  }
  func.func @transform_0(%arg0: i32) -> (i32, i32) {
    %c0_i32 = arith.constant 0 : i32
    %c0_i32_0 = arith.constant 0 : i32
    return %arg0, %c0_i32 : i32, i32
  }
  func.func @transform_1(%arg0: i32) -> (i32, i32) {
    %c0_i32 = arith.constant 0 : i32
    %c0_i32_0 = arith.constant 0 : i32
    %c0_i32_1 = arith.constant 0 : i32
    return %c0_i32, %c0_i32_0 : i32, i32
  }
  func.func @transform_2(%arg0: i32) -> (i32, i32) {
    %c0_i32 = arith.constant 0 : i32
    %c0_i32_0 = arith.constant 0 : i32
    return %arg0, %c0_i32 : i32, i32
  }
  func.func @transform_3(%arg0: i32) -> (i32, i32, i32) {
    %c0_i32 = arith.constant 0 : i32
    %c0_i32_0 = arith.constant 0 : i32
    %c0_i32_1 = arith.constant 0 : i32
    %c0_i32_2 = arith.constant 0 : i32
    return %c0_i32, %c0_i32_0, %c0_i32_1 : i32, i32, i32
  }
  func.func @transform_4(%arg0: i32) -> (i32, i32, i32) {
    %c0_i32 = arith.constant 0 : i32
    %c0_i32_0 = arith.constant 0 : i32
    %c0_i32_1 = arith.constant 0 : i32
    %c0_i32_2 = arith.constant 0 : i32
    return %c0_i32, %c0_i32_0, %c0_i32_1 : i32, i32, i32
  }
  func.func @transform_5(%arg0: i32) -> (i32, i32, i32) {
    %c0_i32 = arith.constant 0 : i32
    %c0_i32_0 = arith.constant 0 : i32
    %c0_i32_1 = arith.constant 0 : i32
    %c0_i32_2 = arith.constant 0 : i32
    return %c0_i32, %c0_i32_0, %c0_i32_1 : i32, i32, i32
  }
  func.func @transform_6(%arg0: i32) -> (i32, i32, i32) {
    %c0_i32 = arith.constant 0 : i32
    %c0_i32_0 = arith.constant 0 : i32
    %c0_i32_1 = arith.constant 0 : i32
    %c0_i32_2 = arith.constant 0 : i32
    return %c0_i32, %c0_i32_0, %c0_i32_1 : i32, i32, i32
  }
  func.func @transform_7(%arg0: i32) -> (i32, i32, i32) {
    %c0_i32 = arith.constant 0 : i32
    %c0_i32_0 = arith.constant 0 : i32
    %c0_i32_1 = arith.constant 0 : i32
    %c0_i32_2 = arith.constant 0 : i32
    return %c0_i32, %c0_i32_0, %c0_i32_1 : i32, i32, i32
  }
  func.func @transform_8(%arg0: i32) -> (i32, i32) {
    %c0_i32 = arith.constant 0 : i32
    %c0_i32_0 = arith.constant 0 : i32
    %c0_i32_1 = arith.constant 0 : i32
    return %c0_i32, %c0_i32_0 : i32, i32
  }
  func.func @transform_9(%arg0: i32) -> (i32, i32) {
    %c0_i32 = arith.constant 0 : i32
    %c0_i32_0 = arith.constant 0 : i32
    %c0_i32_1 = arith.constant 0 : i32
    return %c0_i32, %c0_i32_0 : i32, i32
  }
}

</mosaic_0001>

<llo_original>
// kernel: _forward_impl.1
$region0: #{_forward_impl.1}
  #allocation0 [shape = 'u32[]', space=smem, size = 0x4, offset = 0x4, fixed_abs, tag = 'smem constant byte address 0x4 - core index']
  #allocation1 [shape = 'u32[72,128]{1,0:T(1,128)}', space=vmem, size = 0x9000, scoped, tag = 'internal scratch']
  #allocation2 [shape = 'f32[2,8,32]{2,1,0:T(8,128)}', space=vmem, size = 0x2000, scoped, tag = 'scratch operand']
  #allocation3 [shape = 'f32[1,1]{1,0:T(1,128)S(1)}', space=vmem, size = 0x200, scoped, tag = 'scoped memory for _forward_impl.1']
  %s0 = inlined_call_operand.vmem [shape: bf16[80,128], index: 0, kind: input, shape index: {}]
  %s1 = inlined_call_operand.vmem [shape: bf16[128,64], index: 1, kind: input, shape index: {}]
  %s2 = inlined_call_operand.vmem [shape: f32[80,8], index: 2, kind: input, shape index: {}]
  %s3 = inlined_call_operand.vmem [shape: f32[2,64,32], index: 3, kind: input, shape index: {}]
  %s4 = inlined_call_operand.vmem [shape: f32[2,8,32], index: 4, kind: input, shape index: {}]
  %s5 = inlined_call_operand.vmem [shape: f32[2,32,16], index: 5, kind: input, shape index: {}]
  %s6 = inlined_call_operand.vmem [shape: f32[2,1,16], index: 6, kind: input, shape index: {}]
  %s7 = inlined_call_operand.vmem [shape: f32[2,1,16], index: 7, kind: input, shape index: {}]
  %s8 = inlined_call_operand.<no memory space> [shape: f32[1,1], index: 8, kind: input, shape index: {}]
  %s9 = inlined_call_operand.vmem [shape: f32[8,1], index: 9, kind: output, shape index: {}]
  %s10 = sld [smem:[#allocation0]]
  $region77: #{_forward_impl.1} parent=0
    _
  %s12 = ssub.s32 1, %s10
  %s13 = scalar_select 0, %s12, %s10
  %v14 = vstv %s8
  %15 = vst [vmem:[#allocation3] sm:$0x1] %v14
  loop: start=0, step=1, limit=7
  $region2: #{_forward_impl.1} parent=0 // loop_pre_header
    _
  $region3: #{_forward_impl.1} parent=0 // loop_header
    %s17 = sphi 0, %s21
    %p18 = scmp.ge.s32.totalorder %s17, 7
    %s27 = sphi 0, %s29
    %s30 = sphi 0, %s27
    %s31 = sphi 0, %s30
    %s47 = sphi 0, %s31
    %s51 = sphi 0, %s51
    %s53 = sphi 0, %s51
    %s54 = sphi 0, %s53
    %s68 = sphi 0, %s54
    %s74 = sphi 0, %s76
    %s77 = sphi 0, %s74
    %s78 = sphi 0, %s77
    %s94 = sphi 0, %s78
    %s98 = sphi 0, %s98
    %s100 = sphi 0, %s98
    %s101 = sphi 0, %s100
    %s115 = sphi 0, %s101
    %s119 = sphi 0, %s119
    %s121 = sphi 0, %s119
    %s122 = sphi 0, %s121
    %s136 = sphi 0, %s122
    %s140 = sphi 0, %s140
    %s142 = sphi 0, %s140
    %s143 = sphi 0, %s142
    %s157 = sphi 0, %s143
    %s161 = sphi 0, %s161
    %s163 = sphi 0, %s161
    %s164 = sphi 0, %s163
    %s178 = sphi 0, %s164
    %s182 = sphi 0, %s182
    %s184 = sphi 0, %s182
    %s185 = sphi 0, %s184
    %s199 = sphi 0, %s185
    %s203 = sphi 0, %s203
    %s205 = sphi 0, %s203
    %s206 = sphi 0, %s205
    %s220 = sphi 0, %s206
    %s224 = sphi 0, %s224
    %s226 = sphi 0, %s224
    %s227 = sphi 0, %s226
    %s241 = sphi 0, %s227
  $region4: #{_forward_impl.1} parent=0 // loop_header_branch
    %20 = sbr.rel (%p18) target = $region8
  $region5: #{_forward_impl.1} parent=0 // loop_body
    %s22 = ssub.s32 %s17, 1
    %s23 = ssub.s32 %s17, 2
    %s24 = sadd.s32 %s17, 1
    %s25 = ssub.s32 %s17, %s24
    %p26 = scmp.eq.s32.totalorder %s25, 0
    %s28 = sadd.s32 %s27, 1
    %s29 = scalar_select %p26, %s27, %s28
    %p32 = pneg %p26
    %p33 = scmp.eq.s32.totalorder %s17, 4
    %p34 = por %p32, %p33
    %p35 = scmp.ne.s32.totalorder %s27, %s30
    %p36 = scmp.eq.s32.totalorder %s17, 0
    %p37 = por %p35, %p36
    %p38 = scmp.ne.s32.totalorder %s27, %s30
    %p39 = scmp.eq.s32.totalorder %s22, 4
    %p40 = por %p38, %p39
    %p41 = scmp.ne.s32.totalorder %s30, %s31
    %p42 = scmp.eq.s32.totalorder %s22, 0
    %p43 = por %p41, %p42
    %p44 = scmp.ne.s32.totalorder %s30, %s31
    %p45 = scmp.eq.s32.totalorder %s23, 4
    %p46 = por %p44, %p45
    %p48 = scmp.ne.s32.totalorder %s31, %s47
    %p49 = scmp.eq.s32.totalorder %s23, 0
    %p50 = por %p48, %p49
    %s52 = sadd.s32 %s51, 1
    %p55 = scmp.eq.s32.totalorder %s17, 4
    %p56 = scmp.ne.s32.totalorder %s51, %s53
    %p57 = scmp.eq.s32.totalorder %s17, 0
    %p58 = por %p56, %p57
    %p59 = scmp.ne.s32.totalorder %s51, %s53
    %p60 = scmp.eq.s32.totalorder %s22, 4
    %p61 = por %p59, %p60
    %p62 = scmp.ne.s32.totalorder %s53, %s54
    %p63 = scmp.eq.s32.totalorder %s22, 0
    %p64 = por %p62, %p63
    %p65 = scmp.ne.s32.totalorder %s53, %s54
    %p66 = scmp.eq.s32.totalorder %s23, 4
    %p67 = por %p65, %p66
    %p69 = scmp.ne.s32.totalorder %s54, %s68
    %p70 = scmp.eq.s32.totalorder %s23, 0
    %p71 = por %p69, %p70
    %s72 = ssub.s32 %s17, %s24
    %p73 = scmp.eq.s32.totalorder %s72, 0
    %s75 = sadd.s32 %s74, 1
    %s76 = scalar_select %p73, %s74, %s75
    %p79 = pneg %p73
    %p80 = scmp.eq.s32.totalorder %s17, 4
    %p81 = por %p79, %p80
    %p82 = scmp.ne.s32.totalorder %s74, %s77
    %p83 = scmp.eq.s32.totalorder %s17, 0
    %p84 = por %p82, %p83
    %p85 = scmp.ne.s32.totalorder %s74, %s77
    %p86 = scmp.eq.s32.totalorder %s22, 4
    %p87 = por %p85, %p86
    %p88 = scmp.ne.s32.totalorder %s77, %s78
    %p89 = scmp.eq.s32.totalorder %s22, 0
    %p90 = por %p88, %p89
    %p91 = scmp.ne.s32.totalorder %s77, %s78
    %p92 = scmp.eq.s32.totalorder %s23, 4
    %p93 = por %p91, %p92
    %p95 = scmp.ne.s32.totalorder %s78, %s94
    %p96 = scmp.eq.s32.totalorder %s23, 0
    %p97 = por %p95, %p96
    %s99 = sadd.s32 %s98, 1
    %p102 = scmp.eq.s32.totalorder %s17, 4
    %p103 = scmp.ne.s32.totalorder %s98, %s100
    %p104 = scmp.eq.s32.totalorder %s17, 0
    %p105 = por %p103, %p104
    %p106 = scmp.ne.s32.totalorder %s98, %s100
    %p107 = scmp.eq.s32.totalorder %s22, 4
    %p108 = por %p106, %p107
    %p109 = scmp.ne.s32.totalorder %s100, %s101
    %p110 = scmp.eq.s32.totalorder %s22, 0
    %p111 = por %p109, %p110
    %p112 = scmp.ne.s32.totalorder %s100, %s101
    %p113 = scmp.eq.s32.totalorder %s23, 4
    %p114 = por %p112, %p113
    %p116 = scmp.ne.s32.totalorder %s101, %s115
    %p117 = scmp.eq.s32.totalorder %s23, 0
    %p118 = por %p116, %p117
    %s120 = sadd.s32 %s119, 1
    %p123 = scmp.eq.s32.totalorder %s17, 4
    %p124 = scmp.ne.s32.totalorder %s119, %s121
    %p125 = scmp.eq.s32.totalorder %s17, 0
    %p126 = por %p124, %p125
    %p127 = scmp.ne.s32.totalorder %s119, %s121
    %p128 = scmp.eq.s32.totalorder %s22, 4
    %p129 = por %p127, %p128
    %p130 = scmp.ne.s32.totalorder %s121, %s122
    %p131 = scmp.eq.s32.totalorder %s22, 0
    %p132 = por %p130, %p131
    %p133 = scmp.ne.s32.totalorder %s121, %s122
    %p134 = scmp.eq.s32.totalorder %s23, 4
    %p135 = por %p133, %p134
    %p137 = scmp.ne.s32.totalorder %s122, %s136
    %p138 = scmp.eq.s32.totalorder %s23, 0
    %p139 = por %p137, %p138
    %s141 = sadd.s32 %s140, 1
    %p144 = scmp.eq.s32.totalorder %s17, 4
    %p145 = scmp.ne.s32.totalorder %s140, %s142
    %p146 = scmp.eq.s32.totalorder %s17, 0
    %p147 = por %p145, %p146
    %p148 = scmp.ne.s32.totalorder %s140, %s142
    %p149 = scmp.eq.s32.totalorder %s22, 4
    %p150 = por %p148, %p149
    %p151 = scmp.ne.s32.totalorder %s142, %s143
    %p152 = scmp.eq.s32.totalorder %s22, 0
    %p153 = por %p151, %p152
    %p154 = scmp.ne.s32.totalorder %s142, %s143
    %p155 = scmp.eq.s32.totalorder %s23, 4
    %p156 = por %p154, %p155
    %p158 = scmp.ne.s32.totalorder %s143, %s157
    %p159 = scmp.eq.s32.totalorder %s23, 0
    %p160 = por %p158, %p159
    %s162 = sadd.s32 %s161, 1
    %p165 = scmp.eq.s32.totalorder %s17, 4
    %p166 = scmp.ne.s32.totalorder %s161, %s163
    %p167 = scmp.eq.s32.totalorder %s17, 0
    %p168 = por %p166, %p167
    %p169 = scmp.ne.s32.totalorder %s161, %s163
    %p170 = scmp.eq.s32.totalorder %s22, 4
    %p171 = por %p169, %p170
    %p172 = scmp.ne.s32.totalorder %s163, %s164
    %p173 = scmp.eq.s32.totalorder %s22, 0
    %p174 = por %p172, %p173
    %p175 = scmp.ne.s32.totalorder %s163, %s164
    %p176 = scmp.eq.s32.totalorder %s23, 4
    %p177 = por %p175, %p176
    %p179 = scmp.ne.s32.totalorder %s164, %s178
    %p180 = scmp.eq.s32.totalorder %s23, 0
    %p181 = por %p179, %p180
    %s183 = sadd.s32 %s182, 1
    %p186 = scmp.eq.s32.totalorder %s17, 4
    %p187 = scmp.ne.s32.totalorder %s182, %s184
    %p188 = scmp.eq.s32.totalorder %s17, 0
    %p189 = por %p187, %p188
    %p190 = scmp.ne.s32.totalorder %s182, %s184
    %p191 = scmp.eq.s32.totalorder %s22, 4
    %p192 = por %p190, %p191
    %p193 = scmp.ne.s32.totalorder %s184, %s185
    %p194 = scmp.eq.s32.totalorder %s22, 0
    %p195 = por %p193, %p194
    %p196 = scmp.ne.s32.totalorder %s184, %s185
    %p197 = scmp.eq.s32.totalorder %s23, 4
    %p198 = por %p196, %p197
    %p200 = scmp.ne.s32.totalorder %s185, %s199
    %p201 = scmp.eq.s32.totalorder %s23, 0
    %p202 = por %p200, %p201
    %s204 = sadd.s32 %s203, 1
    %p207 = scmp.eq.s32.totalorder %s17, 4
    %p208 = scmp.ne.s32.totalorder %s203, %s205
    %p209 = scmp.eq.s32.totalorder %s17, 0
    %p210 = por %p208, %p209
    %p211 = scmp.ne.s32.totalorder %s203, %s205
    %p212 = scmp.eq.s32.totalorder %s22, 4
    %p213 = por %p211, %p212
    %p214 = scmp.ne.s32.totalorder %s205, %s206
    %p215 = scmp.eq.s32.totalorder %s22, 0
    %p216 = por %p214, %p215
    %p217 = scmp.ne.s32.totalorder %s205, %s206
    %p218 = scmp.eq.s32.totalorder %s23, 4
    %p219 = por %p217, %p218
    %p221 = scmp.ne.s32.totalorder %s206, %s220
    %p222 = scmp.eq.s32.totalorder %s23, 0
    %p223 = por %p221, %p222
    %s225 = sadd.s32 %s224, 1
    %p228 = scmp.eq.s32.totalorder %s17, 4
    %p229 = scmp.ne.s32.totalorder %s224, %s226
    %p230 = scmp.eq.s32.totalorder %s17, 0
    %p231 = por %p229, %p230
    %p232 = scmp.ne.s32.totalorder %s224, %s226
    %p233 = scmp.eq.s32.totalorder %s22, 4
    %p234 = por %p232, %p233
    %p235 = scmp.ne.s32.totalorder %s226, %s227
    %p236 = scmp.eq.s32.totalorder %s22, 0
    %p237 = por %p235, %p236
    %p238 = scmp.ne.s32.totalorder %s226, %s227
    %p239 = scmp.eq.s32.totalorder %s23, 4
    %p240 = por %p238, %p239
    %p242 = scmp.ne.s32.totalorder %s227, %s241
    %p243 = scmp.eq.s32.totalorder %s23, 0
    %p244 = por %p242, %p243
    %p245 = scmp.le.s32.totalorder 1, %s17
    %p246 = scmp.lt.s32.totalorder %s17, 6
    %p247 = pnand %p245, %p246
    %p248 = pneg %p247
    // Predicated region
    $region9: #{_forward_impl.1} parent=5 // pred_check
      _
    $region10: #{_forward_impl.1} parent=5 // pred_check_branch
      %250 = sbr.rel (%p247) target = $region12
    $region11: #{_forward_impl.1} parent=5 // pred_region
      %s251 = ssub.s32 %s17, 1
      // Predicated region
      $region13: #{_forward_impl.1} parent=11 // pred_check
        %p252 = pneg %p64
      $region14: #{_forward_impl.1} parent=11 // pred_check_branch
        %254 = sbr.rel (%p252) target = $region16
      $region15: #{_forward_impl.1} parent=11 // pred_region
        _
      $region16: #{_forward_impl.1} parent=11 // pred_fallthru
        _
      // Predicated region
      $region17: #{_forward_impl.1} parent=11 // pred_check
        %p255 = pneg %p111
      $region18: #{_forward_impl.1} parent=11 // pred_check_branch
        %257 = sbr.rel (%p255) target = $region20
      $region19: #{_forward_impl.1} parent=11 // pred_region
        _
      $region20: #{_forward_impl.1} parent=11 // pred_fallthru
        _
      // Predicated region
      $region21: #{_forward_impl.1} parent=11 // pred_check
        %p258 = pneg %p132
      $region22: #{_forward_impl.1} parent=11 // pred_check_branch
        %260 = sbr.rel (%p258) target = $region24
      $region23: #{_forward_impl.1} parent=11 // pred_region
        _
      $region24: #{_forward_impl.1} parent=11 // pred_fallthru
        _
      // Predicated region
      $region25: #{_forward_impl.1} parent=11 // pred_check
        %p261 = pneg %p153
      $region26: #{_forward_impl.1} parent=11 // pred_check_branch
        %263 = sbr.rel (%p261) target = $region28
      $region27: #{_forward_impl.1} parent=11 // pred_region
        _
      $region28: #{_forward_impl.1} parent=11 // pred_fallthru
        _
      // Predicated region
      $region29: #{_forward_impl.1} parent=11 // pred_check
        %p264 = pneg %p174
      $region30: #{_forward_impl.1} parent=11 // pred_check_branch
        %266 = sbr.rel (%p264) target = $region32
      $region31: #{_forward_impl.1} parent=11 // pred_region
        _
      $region32: #{_forward_impl.1} parent=11 // pred_fallthru
        _
      // Predicated region
      $region33: #{_forward_impl.1} parent=11 // pred_check
        %p267 = pneg %p195
      $region34: #{_forward_impl.1} parent=11 // pred_check_branch
        %269 = sbr.rel (%p267) target = $region36
      $region35: #{_forward_impl.1} parent=11 // pred_region
        _
      $region36: #{_forward_impl.1} parent=11 // pred_fallthru
        _
      // Predicated region
      $region37: #{_forward_impl.1} parent=11 // pred_check
        %p270 = pneg %p216
      $region38: #{_forward_impl.1} parent=11 // pred_check_branch
        %272 = sbr.rel (%p270) target = $region40
      $region39: #{_forward_impl.1} parent=11 // pred_region
        _
      $region40: #{_forward_impl.1} parent=11 // pred_fallthru
        _
    $region12: #{_forward_impl.1} parent=5 // pred_fallthru
      _
    %p273 = scmp.lt.s32.totalorder %s17, 5
    // Predicated region
    $region41: #{_forward_impl.1} parent=5 // pred_check
      %p274 = pneg %p273
    $region42: #{_forward_impl.1} parent=5 // pred_check_branch
      %276 = sbr.rel (%p274) target = $region44
    $region43: #{_forward_impl.1} parent=5 // pred_region
      // Predicated region
      $region45: #{_forward_impl.1} parent=43 // pred_check
        %p277 = pneg %p37
      $region46: #{_forward_impl.1} parent=43 // pred_check_branch
        %279 = sbr.rel (%p277) target = $region48
      $region47: #{_forward_impl.1} parent=43 // pred_region
        %s280 = smul.u32 2, %s17
        %p281 = scmp.lt.s32.totalorder %s280, 9
        %s282 = scalar_select %p281, %s280, 9
        %s283 = smul.addr %s282, 4
        %s284 = scalar_lea.vmem %s0, %s283
        %s285 = smul.u32 2, %s17
      $region48: #{_forward_impl.1} parent=43 // pred_fallthru
        _
      // Predicated region
      $region49: #{_forward_impl.1} parent=43 // pred_check
        %p286 = pneg %p84
      $region50: #{_forward_impl.1} parent=43 // pred_check_branch
        %288 = sbr.rel (%p286) target = $region52
      $region51: #{_forward_impl.1} parent=43 // pred_region
        %s289 = smul.u32 2, %s17
        %p290 = scmp.lt.s32.totalorder %s289, 9
        %s291 = scalar_select %p290, %s289, 9
        %s292 = smul.addr %s291, 8
        %s293 = scalar_lea.vmem %s2, %s292
        %s294 = smul.u32 2, %s17
      $region52: #{_forward_impl.1} parent=43 // pred_fallthru
        _
    $region44: #{_forward_impl.1} parent=5 // pred_fallthru
      _
    %p295 = scmp.le.s32.totalorder 1, %s17
    %p296 = scmp.lt.s32.totalorder %s17, 6
    %p297 = pnand %p295, %p296
    %p298 = pneg %p297
    // Predicated region
    $region53: #{_forward_impl.1} parent=5 // pred_check
      _
    $region54: #{_forward_impl.1} parent=5 // pred_check_branch
      %300 = sbr.rel (%p297) target = $region56
    $region55: #{_forward_impl.1} parent=5 // pred_region
      %s301 = ssub.s32 %s17, 1
      %s302 = smul.u32 2, %s22
      %p303 = scmp.lt.s32.totalorder %s302, 9
      %s304 = scalar_select %p303, %s302, 9
      %s305 = smul.addr %s304, 4
      %s306 = scalar_lea.vmem %s0, %s305
      %p307 = pneg %p43
      %p308 = pneg %p40
      %p309 = pneg %p64
      %p310 = pneg %p61
      %s311 = smul.u32 2, %s22
      %p312 = scmp.lt.s32.totalorder %s311, 9
      %s313 = scalar_select %p312, %s311, 9
      %s314 = smul.addr %s313, 8
      %s315 = scalar_lea.vmem %s2, %s314
      %p316 = pneg %p90
      %p317 = pneg %p87
      %p318 = pneg %p111
      %p319 = pneg %p108
      %p320 = pneg %p132
      %p321 = pneg %p129
      %p322 = pneg %p153
      %p323 = pneg %p150
      %p324 = pneg %p174
      %p325 = pneg %p171
      %p326 = pneg %p195
      %p327 = pneg %p192
      %p328 = pneg %p216
      %p329 = pneg %p213
      %p330 = pneg %p237
      %p331 = pneg %p234
      %s332 = smul.u32 2, %s22
      %p333 = scmp.lt.s32.totalorder %s332, 9
      %s334 = scalar_select %p333, %s332, 9
      %s335 = smul.addr %s334, 4
      %s336 = scalar_lea.vmem %s0, %s335
      %s337 = smul.u32 2, %s22
      %s338 = smul.u32 2, %s22
      %p339 = scmp.lt.s32.totalorder %s338, 9
      %s340 = scalar_select %p339, %s338, 9
      %s341 = smul.addr %s340, 8
      %s342 = scalar_lea.vmem %s2, %s341
      %s343 = smul.u32 2, %s22
      %p344 = scmp.ge.s32.totalorder %s22, 2
      %s345 = scalar_select %p344, 1, 0
      %p346 = scmp.eq.s32.totalorder %s22, 0
      // Predicated region
      $region57: #{_forward_impl.1} parent=55 // pred_check
        %p347 = pneg %p346
      $region58: #{_forward_impl.1} parent=55 // pred_check_branch
        %349 = sbr.rel (%p347) target = $region60
      $region59: #{_forward_impl.1} parent=55 // pred_region
        %vm350 = vcmask 261120
        %351 = vst.msk [vmem:[#allocation2] sm:$0xff] %vm350, 0.0
        %352 = vst.msk [vmem:[#allocation2 + $0x8] sm:$0xff] %vm350, 0.0
      $region60: #{_forward_impl.1} parent=55 // pred_fallthru
        _
      %v353 = vld [vmem:[%s336] sm:$0xf]
      %v354 = vld [vmem:[%s336 + $0x4] sm:$0xf]
      %v355 = vld [vmem:[%s1] sm:$0xf]
      %v356 = vld [vmem:[%s1 + $0x4] sm:$0xf]
      %v357 = vld [vmem:[%s1 + $0x8] sm:$0xf]
      %v358 = vld [vmem:[%s1 + $0xc] sm:$0xf]
      %v359 = vld [vmem:[%s1 + $0x10] sm:$0xf]
      %v360 = vld [vmem:[%s1 + $0x14] sm:$0xf]
      %v361 = vld [vmem:[%s1 + $0x18] sm:$0xf]
      %v362 = vld [vmem:[%s1 + $0x1c] sm:$0xf]
      %v363 = vld [vmem:[%s1 + $0x20] sm:$0xf]
      %v364 = vld [vmem:[%s1 + $0x24] sm:$0xf]
      %v365 = vld [vmem:[%s1 + $0x28] sm:$0xf]
      %v366 = vld [vmem:[%s1 + $0x2c] sm:$0xf]
      %v367 = vld [vmem:[%s1 + $0x30] sm:$0xf]
      %v368 = vld [vmem:[%s1 + $0x34] sm:$0xf]
      %v369 = vld [vmem:[%s1 + $0x38] sm:$0xf]
      %v370 = vld [vmem:[%s1 + $0x3c] sm:$0xf]
      %v373 = vunpack.c.l.b16 %v353
      %v374 = vunpack.c.l.b16 %v354
      %v375 = vpack.c.b16 %v374, %v373
      %v393 = vunpack.c.l.b16 %v355
      %v394 = vunpack.c.l.b16 %v356
      %v395 = vunpack.c.l.b16 %v357
      %v396 = vunpack.c.l.b16 %v358
      %v397 = vunpack.c.l.b16 %v359
      %v398 = vunpack.c.l.b16 %v360
      %v399 = vunpack.c.l.b16 %v361
      %v400 = vunpack.c.l.b16 %v362
      %v401 = vunpack.c.l.b16 %v363
      %v402 = vunpack.c.l.b16 %v364
      %v403 = vunpack.c.l.b16 %v365
      %v404 = vunpack.c.l.b16 %v366
      %v405 = vunpack.c.l.b16 %v367
      %v406 = vunpack.c.l.b16 %v368
      %v407 = vunpack.c.l.b16 %v369
      %v408 = vunpack.c.l.b16 %v370
      %v409 = vpack.c.b16 %v394, %v393
      %v410 = vpack.c.b16 %v396, %v395
      %v411 = vpack.c.b16 %v398, %v397
      %v412 = vpack.c.b16 %v400, %v399
      %v413 = vpack.c.b16 %v402, %v401
      %v414 = vpack.c.b16 %v404, %v403
      %v415 = vpack.c.b16 %v406, %v405
      %v416 = vpack.c.b16 %v408, %v407
      %425 = vmatpush.bf16.msra.mxu0 %v416
      %426 = vmatpush.bf16.msra.mxu0 %v415
      %427 = vmatpush.bf16.msra.mxu0 %v414
      %428 = vmatpush.bf16.msra.mxu0 %v413
      %429 = vmatpush.bf16.msra.mxu0 %v412
      %430 = vmatpush.bf16.msra.mxu0 %v411
      %431 = vmatpush.bf16.msra.mxu0 %v410
      %432 = vmatpush.bf16.msra.mxu0 %v409
      %433 = vmatmul.bf16.gmra.mxu0 %v375
      %v434 = vpop.f32.mrf.mxu0
      %v435 = vadd.f32 0.0, %v434
      %v436 = vpop.f32.mrf.mxu0
      %v437 = vadd.f32 0.0, %v436
      %438 = vdwg.mxu0
      %s439 = smul.u32 %s345, 64
      %s440 = scalar_lea.vmem %s3, %s439
      %v441 = vld [vmem:[%s440] sm:$0xff]
      %v442 = vld [vmem:[%s440 + $0x8] sm:$0xff]
      %v443 = vld [vmem:[%s440 + $0x10] sm:$0xff]
      %v444 = vld [vmem:[%s440 + $0x18] sm:$0xff]
      %v445 = vld [vmem:[%s440 + $0x20] sm:$0xff]
      %v446 = vld [vmem:[%s440 + $0x28] sm:$0xff]
      %v447 = vld [vmem:[%s440 + $0x30] sm:$0xff]
      %v448 = vld [vmem:[%s440 + $0x38] sm:$0xff]
      %vm449 = vcmask 523264
      %v451 = vsel %vm449, %v435, 0
      %v454 = vsel %vm449, %v437, 0
      %456 = vmatpush.msra.mxu0 0.0
      %457 = vmatpush.msra.mxu0 0.0
      %458 = vmatpush.msra.mxu0 0.0
      %459 = vmatpush.msra.mxu0 0.0
      %460 = vmatpush.msra.mxu0 0.0
      %461 = vmatpush.msra.mxu0 0.0
      %462 = vmatpush.msra.mxu0 0.0
      %463 = vmatpush.msra.mxu0 0.0
      %464 = vmatpush.msra.mxu0 %v448
      %465 = vmatpush.msra.mxu0 %v447
      %466 = vmatpush.msra.mxu0 %v446
      %467 = vmatpush.msra.mxu0 %v445
      %468 = vmatpush.msra.mxu0 %v444
      %469 = vmatpush.msra.mxu0 %v443
      %470 = vmatpush.msra.mxu0 %v442
      %471 = vmatpush.msra.mxu0 %v441
      %472 = vmatmul.f32.gmra.mxu0 %v451
      %v473 = vpop.f32.mrf.mxu0
      %v474 = vadd.f32 0.0, %v473
      %475 = vmatmul.f32.gmra.mxu0 %v454
      %v476 = vpop.f32.mrf.mxu0
      %v477 = vadd.f32 0.0, %v476
      %478 = vdwg.mxu0
      %v479 = vld [vmem:[%s342] sm:$0xff]
      %v480 = vld [vmem:[%s342 + $0x8] sm:$0xff]
      %481 = vxpose.xlu0.b32.start [1/16] %v479, 128
      %482 = vxpose.xlu0.b32.cont [2/16] %v480, 128
      %483 = vxpose.xlu0.b32.cont [3/16] 0.0, 128
      %484 = vxpose.xlu0.b32.cont [4/16] 0.0, 128
      %485 = vxpose.xlu0.b32.cont [5/16] 0.0, 128
      %486 = vxpose.xlu0.b32.cont [6/16] 0.0, 128
      %487 = vxpose.xlu0.b32.cont [7/16] 0.0, 128
      %488 = vxpose.xlu0.b32.cont [8/16] 0.0, 128
      %489 = vxpose.xlu0.b32.cont [9/16] 0.0, 128
      %490 = vxpose.xlu0.b32.cont [10/16] 0.0, 128
      %491 = vxpose.xlu0.b32.cont [11/16] 0.0, 128
      %492 = vxpose.xlu0.b32.cont [12/16] 0.0, 128
      %493 = vxpose.xlu0.b32.cont [13/16] 0.0, 128
      %494 = vxpose.xlu0.b32.cont [14/16] 0.0, 128
      %495 = vxpose.xlu0.b32.cont [15/16] 0.0, 128
      %496 = vxpose.xlu0.b32.end [16/16] 0.0, 128
      %v497 = vpop.trf.xlu0
      %v498 = vpop.trf.xlu0
      %v499 = vpop.trf.xlu0
      %v500 = vpop.trf.xlu0
      %v501 = vpop.trf.xlu0
      %v502 = vpop.trf.xlu0
      %v503 = vpop.trf.xlu0
      %v504 = vpop.trf.xlu0
      %v505 = vpop.trf.xlu0
      %v506 = vpop.trf.xlu0
      %v507 = vpop.trf.xlu0
      %v508 = vpop.trf.xlu0
      %v509 = vpop.trf.xlu0
      %v510 = vpop.trf.xlu0
      %v511 = vpop.trf.xlu0
      %v512 = vpop.trf.xlu0
      %vm513 = vcmask 130048
      %v515 = vsel %vm513, %v497, 0
      %517 = vmatpush.msra.mxu0 0.0
      %518 = vmatpush.msra.mxu0 0.0
      %519 = vmatpush.msra.mxu0 0.0
      %520 = vmatpush.msra.mxu0 0.0
      %521 = vmatpush.msra.mxu0 0.0
      %522 = vmatpush.msra.mxu0 0.0
      %523 = vmatpush.msra.mxu0 0.0
      %524 = vmatpush.msra.mxu0 0.0
      %525 = vmatpush.msra.mxu0 0.0
      %526 = vmatpush.msra.mxu0 0.0
      %527 = vmatpush.msra.mxu0 0.0
      %528 = vmatpush.msra.mxu0 0.0
      %529 = vmatpush.msra.mxu0 0.0
      %530 = vmatpush.msra.mxu0 0.0
      %531 = vmatpush.msra.mxu0 %v477
      %532 = vmatpush.msra.mxu0 %v474
      %533 = vmatmul.f32.gmra.mxu0 %v515
      %v534 = vpop.f32.mrf.mxu0
      %v535 = vadd.f32 0.0, %v534
      %536 = vdwg.mxu0
      %s537 = smul.u32 %s345, 8
      %s538 = scalar_lea.vmem [#allocation2], %s537
      %v539 = vld [vmem:[%s538] sm:$0xff]
      %v540 = vadd.f32 %v539, %v535
      %vm541 = vcmask 261120
      %542 = vst.msk [vmem:[%s538] sm:$0xff] %vm541, %v540
      %p543 = scmp.eq.s32.totalorder %s22, 4
      // Predicated region
      $region61: #{_forward_impl.1} parent=55 // pred_check
        %p544 = pneg %p543
      $region62: #{_forward_impl.1} parent=55 // pred_check_branch
        %546 = sbr.rel (%p544) target = $region64
      $region63: #{_forward_impl.1} parent=55 // pred_region
        %v547 = vld [vmem:[#allocation2] sm:$0xff]
        %v548 = vld [vmem:[%s4] sm:$0xff]
        %v549 = vadd.f32 %v547, %v548
        %v550 = vmax.f32 %v549, 0.0
        %s551 = scalar_lea.vmem [#allocation2], 8
        %v552 = vld [vmem:[%s551] sm:$0xff]
        %s553 = scalar_lea.vmem %s4, 8
        %v554 = vld [vmem:[%s553] sm:$0xff]
        %v555 = vadd.f32 %v552, %v554
        %v556 = vmax.f32 %v555, 0.0
        %v557 = vld [vmem:[%s5] sm:$0xff]
        %v558 = vld [vmem:[%s5 + $0x8] sm:$0xff]
        %v559 = vld [vmem:[%s5 + $0x10] sm:$0xff]
        %v560 = vld [vmem:[%s5 + $0x18] sm:$0xff]
        %v561 = vld [vmem:[%s6] sm:$0x1]
        %v563 = vperm.slane %v561, 0
        %v566 = vsel %vm541, %v550, 0
        %568 = vmatpush.msra.mxu0 0.0
        %569 = vmatpush.msra.mxu0 0.0
        %570 = vmatpush.msra.mxu0 0.0
        %571 = vmatpush.msra.mxu0 0.0
        %572 = vmatpush.msra.mxu0 0.0
        %573 = vmatpush.msra.mxu0 0.0
        %574 = vmatpush.msra.mxu0 0.0
        %575 = vmatpush.msra.mxu0 0.0
        %576 = vmatpush.msra.mxu0 0.0
        %577 = vmatpush.msra.mxu0 0.0
        %578 = vmatpush.msra.mxu0 0.0
        %579 = vmatpush.msra.mxu0 0.0
        %580 = vmatpush.msra.mxu0 %v560
        %581 = vmatpush.msra.mxu0 %v559
        %582 = vmatpush.msra.mxu0 %v558
        %583 = vmatpush.msra.mxu0 %v557
        %584 = vmatmul.f32.gmra.mxu0 %v566
        %v585 = vpop.f32.mrf.mxu0
        %v586 = vadd.f32 %v563, %v585
        %587 = vdwg.mxu0
        %v588 = vmax.f32 %v586, 0.0
        %s589 = scalar_lea.vmem %s5, 32
        %v590 = vld [vmem:[%s589] sm:$0xff]
        %v591 = vld [vmem:[%s589 + $0x8] sm:$0xff]
        %v592 = vld [vmem:[%s589 + $0x10] sm:$0xff]
        %v593 = vld [vmem:[%s589 + $0x18] sm:$0xff]
        %s594 = scalar_lea.vmem %s6, 1
        %v595 = vld [vmem:[%s594] sm:$0x1]
        %v597 = vperm.slane %v595, 0
        %v600 = vsel %vm541, %v556, 0
        %602 = vmatpush.msra.mxu0 0.0
        %603 = vmatpush.msra.mxu0 0.0
        %604 = vmatpush.msra.mxu0 0.0
        %605 = vmatpush.msra.mxu0 0.0
        %606 = vmatpush.msra.mxu0 0.0
        %607 = vmatpush.msra.mxu0 0.0
        %608 = vmatpush.msra.mxu0 0.0
        %609 = vmatpush.msra.mxu0 0.0
        %610 = vmatpush.msra.mxu0 0.0
        %611 = vmatpush.msra.mxu0 0.0
        %612 = vmatpush.msra.mxu0 0.0
        %613 = vmatpush.msra.mxu0 0.0
        %614 = vmatpush.msra.mxu0 %v593
        %615 = vmatpush.msra.mxu0 %v592
        %616 = vmatpush.msra.mxu0 %v591
        %617 = vmatpush.msra.mxu0 %v590
        %618 = vmatmul.f32.gmra.mxu0 %v600
        %v619 = vpop.f32.mrf.mxu0
        %v620 = vadd.f32 %v597, %v619
        %621 = vdwg.mxu0
        %v622 = vmax.f32 %v620, 0.0
        %v623 = vld [vmem:[%s7] sm:$0x1]
        %v625 = vperm.slane %v623, 0
        %v627 = vmul.f32 %v588, %v625
        %v628 = vsel %vm513, %v627, 0.0
        %629 = vadd.xlane.f32.xlu0 %v628
        %v630 = vpop.xlane.xlu0 %629
        %s631 = scalar_lea.vmem %s7, 1
        %v632 = vld [vmem:[%s631] sm:$0x1]
        %v634 = vperm.slane %v632, 0
        %v636 = vmul.f32 %v622, %v634
        %v637 = vsel %vm513, %v636, 0.0
        %638 = vadd.xlane.f32.xlu0 %v637
        %v639 = vpop.xlane.xlu0 %638
        %v640 = vadd.f32 %v630, %v639
        %v641 = vld [vmem:[#allocation3] sm:$0x1]
        %v643 = vperm.slane %v641, 0
        %v645 = vadd.f32 %v640, %v643
        %vm646 = vcmask 7168
        %647 = vst.msk [vmem:[%s9] sm:$0xff] %vm646, %v645
      $region64: #{_forward_impl.1} parent=55 // pred_fallthru
        _
      // Predicated region
      $region65: #{_forward_impl.1} parent=55 // pred_check
        %p648 = pneg %p234
      $region66: #{_forward_impl.1} parent=55 // pred_check_branch
        %650 = sbr.rel (%p648) target = $region68
      $region67: #{_forward_impl.1} parent=55 // pred_region
        _
      $region68: #{_forward_impl.1} parent=55 // pred_fallthru
        _
      // Predicated region
      $region69: #{_forward_impl.1} parent=55 // pred_check
        %p651 = pneg %p234
      $region70: #{_forward_impl.1} parent=55 // pred_check_branch
        %653 = sbr.rel (%p651) target = $region72
      $region71: #{_forward_impl.1} parent=55 // pred_region
        _
      $region72: #{_forward_impl.1} parent=55 // pred_fallthru
        _
    $region56: #{_forward_impl.1} parent=5 // pred_fallthru
      _
    %p654 = scmp.le.s32.totalorder 2, %s17
    // Predicated region
    $region73: #{_forward_impl.1} parent=5 // pred_check
      %p655 = pneg %p654
    $region74: #{_forward_impl.1} parent=5 // pred_check_branch
      %657 = sbr.rel (%p655) target = $region76
    $region75: #{_forward_impl.1} parent=5 // pred_region
      %s658 = ssub.s32 %s17, 2
    $region76: #{_forward_impl.1} parent=5 // pred_fallthru
      _
  $region6: #{_forward_impl.1} parent=0 // loop_footer
    %s21 = sadd.s32 1, %s17
  $region7: #{_forward_impl.1} parent=0 // loop_footer_branch
    %16 = sbr.rel target = $region3
  $region8: #{_forward_impl.1} parent=0 // loop_exit
    _

</llo_original>
